<compile_context>
chip_gen: v6e
topology: v6e:2x2x1
jax: 0.10.0
libtpu: 0.0.40
codegen_flags: <defaults>
</compile_context>

<pallas_src>
import numpy as np

import jax
import jax.numpy as jnp
from jax.experimental import pallas as pl
from jax.experimental.pallas import tpu as pltpu

BN_EPS = 1e-5
LANE_PAD = 128  # pad every feature axis to the 128-lane vreg width


# ---------------------------------------------------------------------------
# Fused kernel
# ---------------------------------------------------------------------------
def make_fused_mlpnet_kernel(num_layers, matmul_dtype):
    """Whole MLPNet forward in one kernel body (static unroll over layers)."""

    def kernel(x_ref, w_ref, b_ref, o_ref):
        x = x_ref[...]                                # (N, 128) f32, zero-padded
        n = x.shape[0]
        inv_n = jnp.float32(1.0 / n)
        # Hoisted out of the layer loop (JAX does not CSE broadcasts/constants).
        ones_row = jnp.ones((1, n), jnp.float32)

        def batchnorm(v):
            """BatchNorm1d (affine=False, training mode, biased var, eps=1e-5).

            Per-feature sums go through ones-row matmuls (MXU slot) rather than
            axis=0 reductions (XLU slot); two-pass to match PyTorch exactly.
            """
            mean = jnp.dot(ones_row, v, preferred_element_type=jnp.float32) * inv_n
            diff = v - mean
            var = jnp.dot(ones_row, diff * diff,
                          preferred_element_type=jnp.float32) * inv_n
            return diff * jax.lax.rsqrt(var + BN_EPS)

        for l in range(num_layers):                   # static Python unroll
            w = w_ref[l]                              # (128, 128) matmul_dtype
            b = b_ref[l]                              # (1, 128) f32
            if l == num_layers - 1:
                # last layer: BatchNorm1d -> Linear
                xn = batchnorm(x)
                x = jnp.dot(xn.astype(matmul_dtype), w,
                            preferred_element_type=jnp.float32) + b
            else:
                # hidden layer: Linear -> Sigmoid -> BatchNorm1d
                h = jnp.dot(x.astype(matmul_dtype), w,
                            preferred_element_type=jnp.float32) + b
                x = batchnorm(jax.nn.sigmoid(h))      # sigmoid on the EUP slot
        o_ref[...] = x.astype(o_ref.dtype)

    return kernel


# ---------------------------------------------------------------------------
# One-time parameter preparation (hoisted out of the per-call path)
# ---------------------------------------------------------------------------
def _prepare_stacks(params, matmul_dtype):
    """Pad and stack all (W, b) once on the host; verify padding is exact zero."""
    num_layers = len(params)
    in_f = params[0][0].shape[0]
    out_f = params[-1][0].shape[1]

    w_np = np.zeros((num_layers, LANE_PAD, LANE_PAD), np.float32)
    b_np = np.zeros((num_layers, 1, LANE_PAD), np.float32)
    w_pad_mask = np.ones_like(w_np, dtype=bool)
    b_pad_mask = np.ones_like(b_np, dtype=bool)
    for l, (w, b) in enumerate(params):
        fi, fo = w.shape
        assert fi <= LANE_PAD and fo <= LANE_PAD
        w_np[l, :fi, :fo] = np.asarray(w, np.float32)
        b_np[l, 0, :fo] = np.asarray(b, np.float32).reshape(fo)
        w_pad_mask[l, :fi, :fo] = False
        b_pad_mask[l, :, :fo] = False

    # Padded slots must be exactly zero: BN would amplify any leak by
    # rsqrt(var + 1e-5) ~= 316 on a near-constant padded column.
    assert not np.any(w_np[w_pad_mask]) and not np.any(b_np[b_pad_mask]), (
        "padded weight/bias slots must be exactly zero")

    w_stack = jnp.asarray(w_np, dtype=matmul_dtype)   # stored in matmul dtype
    b_stack = jnp.asarray(b_np, dtype=jnp.float32)    # bias add stays f32
    return w_stack, b_stack, in_f, out_f


def preferred_matmul_dtype():
    """bf16 matmul operands on bf16-native MXUs (v6e/v7x); pure f32 elsewhere."""
    try:
        kind = jax.devices()[0].device_kind.lower()
    except Exception:
        return jnp.float32
    if any(tag in kind for tag in ("v6", "v7", "tpu7", "trillium")):
        return jnp.bfloat16
    return jnp.float32


def build_mlpnet_forward(params, matmul_dtype=None):
    """Returns a jitted forward(x) with weights padded/stacked exactly once."""
    if matmul_dtype is None:
        matmul_dtype = preferred_matmul_dtype()
    w_stack, b_stack, in_f, out_f = _prepare_stacks(params, matmul_dtype)
    kernel = make_fused_mlpnet_kernel(len(params), matmul_dtype)

    @jax.jit
    def _forward(w_stack, b_stack, x):
        n = x.shape[0]
        xp = jnp.zeros((n, LANE_PAD), jnp.float32).at[:, :in_f].set(
            x.astype(jnp.float32))
        out_padded = pl.pallas_call(
            kernel,
            out_shape=jax.ShapeDtypeStruct((n, LANE_PAD), jnp.float32),
            in_specs=[
                pl.BlockSpec(memory_space=pltpu.VMEM),   # x  (N, 128)
                pl.BlockSpec(memory_space=pltpu.VMEM),   # W  (L, 128, 128)
                pl.BlockSpec(memory_space=pltpu.VMEM),   # b  (L, 1, 128)
            ],
            out_specs=pl.BlockSpec(memory_space=pltpu.VMEM),
        )(xp, w_stack, b_stack)
        return out_padded[:, :out_f]

    return lambda x: _forward(w_stack, b_stack, x)


# ---------------------------------------------------------------------------
# Parameter init + pure-JAX reference
# ---------------------------------------------------------------------------
def init_mlpnet_params(layer_sizes, key):
    """Deterministic init: one (W, b) per layer, W shaped (in, out)."""
    params = []
    for l_id in range(len(layer_sizes) - 1):
        key, kw, kb = jax.random.split(key, 3)
        fan_in, fan_out = layer_sizes[l_id], layer_sizes[l_id + 1]
        bound = 1.0 / float(fan_in) ** 0.5
        w = jax.random.uniform(kw, (fan_in, fan_out), jnp.float32, -bound, bound)
        b = jax.random.uniform(kb, (1, fan_out), jnp.float32, -bound, bound)
        params.append((w, b))
    return params


def mlpnet_reference(params, x):
    """Pure-JAX f32 reference matching the PyTorch module (training-mode BN)."""
    num_layers = len(params)
    for l_id, (w, b) in enumerate(params):
        if l_id == num_layers - 1:
            mean = jnp.mean(x, axis=0, keepdims=True)
            var = jnp.mean((x - mean) ** 2, axis=0, keepdims=True)
            xn = (x - mean) / jnp.sqrt(var + BN_EPS)
            x = xn @ w + b
        else:
            s = jax.nn.sigmoid(x @ w + b)
            mean = jnp.mean(s, axis=0, keepdims=True)
            var = jnp.mean((s - mean) ** 2, axis=0, keepdims=True)
            x = (s - mean) / jnp.sqrt(var + BN_EPS)
    return x


if __name__ == "__main__":
    layer_sizes = [16, 32, 32, 8]   # small MLP consistent with the module
    batch = 8

    key = jax.random.PRNGKey(0)
    key, kx = jax.random.split(key)
    x = jax.random.normal(kx, (batch, layer_sizes[0]), jnp.float32)
    params = init_mlpnet_params(layer_sizes, key)

    ref = mlpnet_reference(params, x)

    # 1) f32 matmul path: bit-faithful to PyTorch f32 numerics on every TPU gen.
    fwd_f32 = build_mlpnet_forward(params, matmul_dtype=jnp.float32)
    out = jax.block_until_ready(fwd_f32(x))
    assert out.shape == (batch, layer_sizes[-1])
    assert jnp.allclose(out, ref, atol=1e-4, rtol=1e-4), "f32 mismatch vs reference"

    # 2) Device-preferred path: bf16 matmul operands (f32 accumulate) on the
    #    bf16-native MXUs of v6e/v7x; identical to (1) on v5e/other gens.
    pref = preferred_matmul_dtype()
    if pref != jnp.float32:
        fwd_fast = build_mlpnet_forward(params, matmul_dtype=pref)
        out_fast = jax.block_until_ready(fwd_fast(x))
        assert out_fast.shape == (batch, layer_sizes[-1])
        # bf16 operands deviate slightly from the f32 PyTorch reference.
        assert jnp.allclose(out_fast, ref, atol=5e-2, rtol=5e-2), \
            "bf16-matmul mismatch vs reference"

    print("KERNEL_OK")
</pallas_src>

<mosaic_0001>
module attributes {stable_mosaic.version = 11 : i64} {
  func.func @kernel(%arg0: memref<8x128xf32, #tpu.memory_space<vmem>>, %arg1: memref<3x128x128xf32, #tpu.memory_space<vmem>>, %arg2: memref<3x1x128xf32, #tpu.memory_space<vmem>>, %arg3: memref<8x128xf32, #tpu.memory_space<vmem>>) attributes {dimension_semantics = [], scalar_prefetch = 0 : i64, scratch_operands = 0 : i64, tpu.core_type = #tpu.core_type<tc>} {
    %c0 = arith.constant 0 : index
    %c0_0 = arith.constant 0 : index
    %0 = vector.load %arg0[%c0, %c0_0] : memref<8x128xf32, #tpu.memory_space<vmem>>, vector<8x128xf32>
    %cst = arith.constant 1.000000e+00 : f32
    %1 = vector.broadcast %cst : f32 to vector<1x8xf32>
    %c0_1 = arith.constant 0 : index
    %c0_2 = arith.constant 0 : index
    %c0_3 = arith.constant 0 : index
    %2 = vector.load %arg1[%c0_1, %c0_2, %c0_3] : memref<3x128x128xf32, #tpu.memory_space<vmem>>, vector<1x128x128xf32>
    %3 = vector.shape_cast %2 : vector<1x128x128xf32> to vector<128x128xf32>
    %c0_4 = arith.constant 0 : index
    %c0_5 = arith.constant 0 : index
    %c0_6 = arith.constant 0 : index
    %4 = vector.load %arg2[%c0_4, %c0_5, %c0_6] : memref<3x1x128xf32, #tpu.memory_space<vmem>>, vector<1x1x128xf32>
    %5 = vector.shape_cast %4 : vector<1x1x128xf32> to vector<1x128xf32>
    %cst_7 = arith.constant dense<0.000000e+00> : vector<8x128xf32>
    %6 = tpu.matmul %0, %3, %cst_7 {dimension_numbers = #tpu.dot_dimension_numbers<[1], [0], [0], [1], [0, 0, 1, 1], [], []>} : vector<8x128xf32>, vector<128x128xf32>, vector<8x128xf32> -> vector<8x128xf32>
    %7 = vector.broadcast %5 : vector<1x128xf32> to vector<8x128xf32>
    %8 = arith.addf %6, %7 : vector<8x128xf32>
    %9 = arith.negf %8 : vector<8x128xf32>
    %10 = math.exp %9 : vector<8x128xf32>
    %cst_8 = arith.constant 1.000000e+00 : f32
    %11 = vector.broadcast %cst_8 : f32 to vector<8x128xf32>
    %12 = arith.addf %11, %10 : vector<8x128xf32>
    %13 = arith.divf %11, %12 : vector<8x128xf32>
    %cst_9 = arith.constant dense<0.000000e+00> : vector<1x128xf32>
    %14 = tpu.matmul %1, %13, %cst_9 {dimension_numbers = #tpu.dot_dimension_numbers<[1], [0], [0], [1], [0, 0, 1, 1], [], []>} : vector<1x8xf32>, vector<8x128xf32>, vector<1x128xf32> -> vector<1x128xf32>
    %cst_10 = arith.constant 1.250000e-01 : f32
    %15 = vector.broadcast %cst_10 : f32 to vector<1x128xf32>
    %16 = arith.mulf %14, %15 : vector<1x128xf32>
    %17 = vector.broadcast %16 : vector<1x128xf32> to vector<8x128xf32>
    %18 = arith.subf %13, %17 : vector<8x128xf32>
    %19 = arith.mulf %18, %18 : vector<8x128xf32>
    %cst_11 = arith.constant dense<0.000000e+00> : vector<1x128xf32>
    %20 = tpu.matmul %1, %19, %cst_11 {dimension_numbers = #tpu.dot_dimension_numbers<[1], [0], [0], [1], [0, 0, 1, 1], [], []>} : vector<1x8xf32>, vector<8x128xf32>, vector<1x128xf32> -> vector<1x128xf32>
    %cst_12 = arith.constant 1.250000e-01 : f32
    %21 = vector.broadcast %cst_12 : f32 to vector<1x128xf32>
    %22 = arith.mulf %20, %21 : vector<1x128xf32>
    %cst_13 = arith.constant 9.99999974E-6 : f32
    %23 = vector.broadcast %cst_13 : f32 to vector<1x128xf32>
    %24 = arith.addf %22, %23 : vector<1x128xf32>
    %25 = math.rsqrt %24 : vector<1x128xf32>
    %26 = vector.broadcast %25 : vector<1x128xf32> to vector<8x128xf32>
    %27 = arith.mulf %18, %26 : vector<8x128xf32>
    %c1 = arith.constant 1 : index
    %c0_14 = arith.constant 0 : index
    %c0_15 = arith.constant 0 : index
    %28 = vector.load %arg1[%c1, %c0_14, %c0_15] : memref<3x128x128xf32, #tpu.memory_space<vmem>>, vector<1x128x128xf32>
    %29 = vector.shape_cast %28 : vector<1x128x128xf32> to vector<128x128xf32>
    %c1_16 = arith.constant 1 : index
    %c0_17 = arith.constant 0 : index
    %c0_18 = arith.constant 0 : index
    %30 = vector.load %arg2[%c1_16, %c0_17, %c0_18] : memref<3x1x128xf32, #tpu.memory_space<vmem>>, vector<1x1x128xf32>
    %31 = vector.shape_cast %30 : vector<1x1x128xf32> to vector<1x128xf32>
    %cst_19 = arith.constant dense<0.000000e+00> : vector<8x128xf32>
    %32 = tpu.matmul %27, %29, %cst_19 {dimension_numbers = #tpu.dot_dimension_numbers<[1], [0], [0], [1], [0, 0, 1, 1], [], []>} : vector<8x128xf32>, vector<128x128xf32>, vector<8x128xf32> -> vector<8x128xf32>
    %33 = vector.broadcast %31 : vector<1x128xf32> to vector<8x128xf32>
    %34 = arith.addf %32, %33 : vector<8x128xf32>
    %35 = arith.negf %34 : vector<8x128xf32>
    %36 = math.exp %35 : vector<8x128xf32>
    %cst_20 = arith.constant 1.000000e+00 : f32
    %37 = vector.broadcast %cst_20 : f32 to vector<8x128xf32>
    %38 = arith.addf %37, %36 : vector<8x128xf32>
    %39 = arith.divf %37, %38 : vector<8x128xf32>
    %cst_21 = arith.constant dense<0.000000e+00> : vector<1x128xf32>
    %40 = tpu.matmul %1, %39, %cst_21 {dimension_numbers = #tpu.dot_dimension_numbers<[1], [0], [0], [1], [0, 0, 1, 1], [], []>} : vector<1x8xf32>, vector<8x128xf32>, vector<1x128xf32> -> vector<1x128xf32>
    %cst_22 = arith.constant 1.250000e-01 : f32
    %41 = vector.broadcast %cst_22 : f32 to vector<1x128xf32>
    %42 = arith.mulf %40, %41 : vector<1x128xf32>
    %43 = vector.broadcast %42 : vector<1x128xf32> to vector<8x128xf32>
    %44 = arith.subf %39, %43 : vector<8x128xf32>
    %45 = arith.mulf %44, %44 : vector<8x128xf32>
    %cst_23 = arith.constant dense<0.000000e+00> : vector<1x128xf32>
    %46 = tpu.matmul %1, %45, %cst_23 {dimension_numbers = #tpu.dot_dimension_numbers<[1], [0], [0], [1], [0, 0, 1, 1], [], []>} : vector<1x8xf32>, vector<8x128xf32>, vector<1x128xf32> -> vector<1x128xf32>
    %cst_24 = arith.constant 1.250000e-01 : f32
    %47 = vector.broadcast %cst_24 : f32 to vector<1x128xf32>
    %48 = arith.mulf %46, %47 : vector<1x128xf32>
    %cst_25 = arith.constant 9.99999974E-6 : f32
    %49 = vector.broadcast %cst_25 : f32 to vector<1x128xf32>
    %50 = arith.addf %48, %49 : vector<1x128xf32>
    %51 = math.rsqrt %50 : vector<1x128xf32>
    %52 = vector.broadcast %51 : vector<1x128xf32> to vector<8x128xf32>
    %53 = arith.mulf %44, %52 : vector<8x128xf32>
    %c2 = arith.constant 2 : index
    %c0_26 = arith.constant 0 : index
    %c0_27 = arith.constant 0 : index
    %54 = vector.load %arg1[%c2, %c0_26, %c0_27] : memref<3x128x128xf32, #tpu.memory_space<vmem>>, vector<1x128x128xf32>
    %55 = vector.shape_cast %54 : vector<1x128x128xf32> to vector<128x128xf32>
    %c2_28 = arith.constant 2 : index
    %c0_29 = arith.constant 0 : index
    %c0_30 = arith.constant 0 : index
    %56 = vector.load %arg2[%c2_28, %c0_29, %c0_30] : memref<3x1x128xf32, #tpu.memory_space<vmem>>, vector<1x1x128xf32>
    %57 = vector.shape_cast %56 : vector<1x1x128xf32> to vector<1x128xf32>
    %cst_31 = arith.constant dense<0.000000e+00> : vector<1x128xf32>
    %58 = tpu.matmul %1, %53, %cst_31 {dimension_numbers = #tpu.dot_dimension_numbers<[1], [0], [0], [1], [0, 0, 1, 1], [], []>} : vector<1x8xf32>, vector<8x128xf32>, vector<1x128xf32> -> vector<1x128xf32>
    %cst_32 = arith.constant 1.250000e-01 : f32
    %59 = vector.broadcast %cst_32 : f32 to vector<1x128xf32>
    %60 = arith.mulf %58, %59 : vector<1x128xf32>
    %61 = vector.broadcast %60 : vector<1x128xf32> to vector<8x128xf32>
    %62 = arith.subf %53, %61 : vector<8x128xf32>
    %63 = arith.mulf %62, %62 : vector<8x128xf32>
    %cst_33 = arith.constant dense<0.000000e+00> : vector<1x128xf32>
    %64 = tpu.matmul %1, %63, %cst_33 {dimension_numbers = #tpu.dot_dimension_numbers<[1], [0], [0], [1], [0, 0, 1, 1], [], []>} : vector<1x8xf32>, vector<8x128xf32>, vector<1x128xf32> -> vector<1x128xf32>
    %cst_34 = arith.constant 1.250000e-01 : f32
    %65 = vector.broadcast %cst_34 : f32 to vector<1x128xf32>
    %66 = arith.mulf %64, %65 : vector<1x128xf32>
    %cst_35 = arith.constant 9.99999974E-6 : f32
    %67 = vector.broadcast %cst_35 : f32 to vector<1x128xf32>
    %68 = arith.addf %66, %67 : vector<1x128xf32>
    %69 = math.rsqrt %68 : vector<1x128xf32>
    %70 = vector.broadcast %69 : vector<1x128xf32> to vector<8x128xf32>
    %71 = arith.mulf %62, %70 : vector<8x128xf32>
    %cst_36 = arith.constant dense<0.000000e+00> : vector<8x128xf32>
    %72 = tpu.matmul %71, %55, %cst_36 {dimension_numbers = #tpu.dot_dimension_numbers<[1], [0], [0], [1], [0, 0, 1, 1], [], []>} : vector<8x128xf32>, vector<128x128xf32>, vector<8x128xf32> -> vector<8x128xf32>
    %73 = vector.broadcast %57 : vector<1x128xf32> to vector<8x128xf32>
    %74 = arith.addf %72, %73 : vector<8x128xf32>
    %c0_37 = arith.constant 0 : index
    %c0_38 = arith.constant 0 : index
    %75 = vector.load %arg3[%c0_37, %c0_38] : memref<8x128xf32, #tpu.memory_space<vmem>>, vector<8x128xf32>
    tpu.vector_store %arg3[%c0_37, %c0_38], %74 {strides = array<i32>} : memref<8x128xf32, #tpu.memory_space<vmem>>, vector<8x128xf32>,
    return
  }
}

</mosaic_0001>

<llo_original>
// kernel: _forward.1
$region0: #{_forward.1}
  #allocation0 [shape = 'u32[]', space=smem, size = 0x4, offset = 0x4, fixed_abs, tag = 'smem constant byte address 0x4 - core index']
  #allocation1 [shape = 'u32[144,128]{1,0:T(1,128)}', space=vmem, size = 0x12000, scoped, tag = 'internal scratch']
  %s0 = inlined_call_operand.vmem [shape: f32[8,128], index: 0, kind: input, shape index: {}]
  %s1 = inlined_call_operand.hbm [shape: f32[3,128,128], index: 1, kind: input, shape index: {}]
  %s2 = inlined_call_operand.vmem [shape: f32[3,1,128], index: 2, kind: input, shape index: {}]
  %s3 = inlined_call_operand.hbm [shape: f32[8,128], index: 3, kind: output, shape index: {}]
  %s4 = sld [smem:[#allocation0]]
  $region26: #{_forward.1} parent=0
    _
  %s6 = ssub.s32 1, %s4
  %s7 = scalar_select 0, %s6, %s4
  $region1: #{_forward.1} parent=0
    #allocation2 [shape = 'u8[196608]{0}', space=vmem, size = 0x30000, scoped, tag = 'input window, operand 1, single buffered']
    #allocation3 [shape = 's32[1]{0}', space=sflag, size = 0x4, scoped, tag = 'scoped memory for _forward.1']
    #allocation4 [shape = 's32[1]{0}', space=sflag, size = 0x4, scoped, tag = 'scoped memory for _forward.1']
    #allocation5 [shape = 'u8[4096]{0}', space=vmem, size = 0x1000, scoped, tag = 'output window, operand 0, single buffered']
    %8 = vsyncpa [#allocation3], 0
    %9 = vsyncpa [#allocation4], 0
    // Predicated region
    $region2: #{_forward.1} parent=1 // pred_check
      _
    $region3: #{_forward.1} parent=1 // pred_check_branch
      %11 = sbr.rel (0) target = $region5
    $region4: #{_forward.1} parent=1 // pred_region
      _
    $region5: #{_forward.1} parent=1 // pred_fallthru
      _
    // Predicated region
    $region6: #{_forward.1} parent=1 // pred_check
      _
    $region7: #{_forward.1} parent=1 // pred_check_branch
      %13 = sbr.rel (0) target = $region9
    $region8: #{_forward.1} parent=1 // pred_region
      %s15 = ssub.s32 6144, 6144
      %16 = vsyncadd [#allocation3], %s15
      %s17 = sshll.u32 [#allocation2], 4
      %s18 = int_to_ptr.vmem [resolvable:$true] %s17
      %23 = dma.hbm_to_vmem [thread:$0]  %s1, 6144, %s18, [#allocation3], 128, 128, 8
    $region9: #{_forward.1} parent=1 // pred_fallthru
      _
    // Predicated region
    $region10: #{_forward.1} parent=1 // pred_check
      _
    $region11: #{_forward.1} parent=1 // pred_check_branch
      %25 = sbr.rel (0) target = $region13
    $region12: #{_forward.1} parent=1 // pred_region
      _
    $region13: #{_forward.1} parent=1 // pred_fallthru
      _
    // Predicated region
    $region14: #{_forward.1} parent=1 // pred_check
      _
    $region15: #{_forward.1} parent=1 // pred_check_branch
      %27 = sbr.rel (0) target = $region17
    $region16: #{_forward.1} parent=1 // pred_region
      %28 = dma.done [#allocation3], 6144
    $region17: #{_forward.1} parent=1 // pred_fallthru
      _
    %v29 = vld [vmem:[%s0] sm:$0xff]
    %v30 = vld [vmem:[#allocation2] sm:$0xff]
    %v31 = vld [vmem:[#allocation2 + $0x8] sm:$0xff]
    %v32 = vld [vmem:[#allocation2 + $0x10] sm:$0xff]
    %v33 = vld [vmem:[#allocation2 + $0x18] sm:$0xff]
    %v34 = vld [vmem:[#allocation2 + $0x20] sm:$0xff]
    %v35 = vld [vmem:[#allocation2 + $0x28] sm:$0xff]
    %v36 = vld [vmem:[#allocation2 + $0x30] sm:$0xff]
    %v37 = vld [vmem:[#allocation2 + $0x38] sm:$0xff]
    %v38 = vld [vmem:[#allocation2 + $0x40] sm:$0xff]
    %v39 = vld [vmem:[#allocation2 + $0x48] sm:$0xff]
    %v40 = vld [vmem:[#allocation2 + $0x50] sm:$0xff]
    %v41 = vld [vmem:[#allocation2 + $0x58] sm:$0xff]
    %v42 = vld [vmem:[#allocation2 + $0x60] sm:$0xff]
    %v43 = vld [vmem:[#allocation2 + $0x68] sm:$0xff]
    %v44 = vld [vmem:[#allocation2 + $0x70] sm:$0xff]
    %v45 = vld [vmem:[#allocation2 + $0x78] sm:$0xff]
    %v46 = vld [vmem:[%s2] sm:$0x1]
    %v48 = vlaneseq
    %v49 = vshrl.u32 %v48, 7
    %v50 = vsub.s32 0, %v49
    %v51 = vrot.slane %v46, %v50
    %53 = vmatprep.subr.mxu0 0.0
    %54 = vmatpush1.msra.mxu0 %v45
    %55 = vmatprep.subr.mxu0 0.0
    %56 = vmatpush1.msra.mxu0 %v44
    %57 = vmatprep.subr.mxu0 0.0
    %58 = vmatpush1.msra.mxu0 %v43
    %59 = vmatprep.subr.mxu0 0.0
    %60 = vmatpush1.msra.mxu0 %v42
    %61 = vmatprep.subr.mxu0 0.0
    %62 = vmatpush1.msra.mxu0 %v41
    %63 = vmatprep.subr.mxu0 0.0
    %64 = vmatpush1.msra.mxu0 %v40
    %65 = vmatprep.subr.mxu0 0.0
    %66 = vmatpush1.msra.mxu0 %v39
    %67 = vmatprep.subr.mxu0 0.0
    %68 = vmatpush1.msra.mxu0 %v38
    %69 = vmatprep.subr.mxu0 0.0
    %70 = vmatpush1.msra.mxu0 %v37
    %71 = vmatprep.subr.mxu0 0.0
    %72 = vmatpush1.msra.mxu0 %v36
    %73 = vmatprep.subr.mxu0 0.0
    %74 = vmatpush1.msra.mxu0 %v35
    %75 = vmatprep.subr.mxu0 0.0
    %76 = vmatpush1.msra.mxu0 %v34
    %77 = vmatprep.subr.mxu0 0.0
    %78 = vmatpush1.msra.mxu0 %v33
    %79 = vmatprep.subr.mxu0 0.0
    %80 = vmatpush1.msra.mxu0 %v32
    %81 = vmatprep.subr.mxu0 0.0
    %82 = vmatpush1.msra.mxu0 %v31
    %83 = vmatprep.subr.mxu0 0.0
    %84 = vmatpush1.msra.mxu0 %v30
    %85 = vmatprep.subr.mxu0 0.0
    %86 = vmatpush2.msra.mxu0 0.0
    %87 = vmatprep.subr.mxu0 0.0
    %88 = vmatpush2.msra.mxu0 0.0
    %89 = vmatprep.subr.mxu0 0.0
    %90 = vmatpush2.msra.mxu0 0.0
    %91 = vmatprep.subr.mxu0 0.0
    %92 = vmatpush2.msra.mxu0 0.0
    %93 = vmatprep.subr.mxu0 0.0
    %94 = vmatpush2.msra.mxu0 0.0
    %95 = vmatprep.subr.mxu0 0.0
    %96 = vmatpush2.msra.mxu0 0.0
    %97 = vmatprep.subr.mxu0 0.0
    %98 = vmatpush2.msra.mxu0 0.0
    %99 = vmatprep.subr.mxu0 0.0
    %100 = vmatpush2.msra.mxu0 0.0
    %101 = vmatprep.subr.mxu0 0.0
    %102 = vmatpush2.msra.mxu0 0.0
    %103 = vmatprep.subr.mxu0 0.0
    %104 = vmatpush2.msra.mxu0 0.0
    %105 = vmatprep.subr.mxu0 0.0
    %106 = vmatpush2.msra.mxu0 0.0
    %107 = vmatprep.subr.mxu0 0.0
    %108 = vmatpush2.msra.mxu0 0.0
    %109 = vmatprep.subr.mxu0 0.0
    %110 = vmatpush2.msra.mxu0 0.0
    %111 = vmatprep.subr.mxu0 0.0
    %112 = vmatpush2.msra.mxu0 0.0
    %113 = vmatprep.subr.mxu0 0.0
    %114 = vmatpush2.msra.mxu0 0.0
    %115 = vmatprep.subr.mxu0 0.0
    %116 = vmatpush2.msra.mxu0 0.0
    %117 = vmatprep.mubr.f32.mxu0 0.0
    %118 = vmatmul.mubr.f32.gmra.mxu0 %v29
    %v119 = vpop.f32.mrf.mxu0
    %v120 = vadd.f32 %v51, %v119
    %v121 = vpop.f32.mrf.mxu0
    %122 = vdwg.mxu0
    %v123 = vxor.u32 %v120, 2147483648
    %v124 = vmul.f32 %v123, 1.442695
    %v125 = vpow.pop %v124
    %v126 = vadd.f32 %v125, 1.0
    %v127 = vrcp.pop %v126
    %v128 = vmul.f32 1.0, %v127
    %vm129 = vcmask 64512
    %v131 = vsel %vm129, 1.0, 0
    %133 = vmatprep.subr.mxu0 0.0
    %134 = vmatpush1.msra.mxu0 0.0
    %135 = vmatprep.subr.mxu0 0.0
    %136 = vmatpush1.msra.mxu0 0.0
    %137 = vmatprep.subr.mxu0 0.0
    %138 = vmatpush1.msra.mxu0 0.0
    %139 = vmatprep.subr.mxu0 0.0
    %140 = vmatpush1.msra.mxu0 0.0
    %141 = vmatprep.subr.mxu0 0.0
    %142 = vmatpush1.msra.mxu0 0.0
    %143 = vmatprep.subr.mxu0 0.0
    %144 = vmatpush1.msra.mxu0 0.0
    %145 = vmatprep.subr.mxu0 0.0
    %146 = vmatpush1.msra.mxu0 0.0
    %147 = vmatprep.subr.mxu0 0.0
    %148 = vmatpush1.msra.mxu0 0.0
    %149 = vmatprep.subr.mxu0 0.0
    %150 = vmatpush1.msra.mxu0 0.0
    %151 = vmatprep.subr.mxu0 0.0
    %152 = vmatpush1.msra.mxu0 0.0
    %153 = vmatprep.subr.mxu0 0.0
    %154 = vmatpush1.msra.mxu0 0.0
    %155 = vmatprep.subr.mxu0 0.0
    %156 = vmatpush1.msra.mxu0 0.0
    %157 = vmatprep.subr.mxu0 0.0
    %158 = vmatpush1.msra.mxu0 0.0
    %159 = vmatprep.subr.mxu0 0.0
    %160 = vmatpush1.msra.mxu0 0.0
    %161 = vmatprep.subr.mxu0 0.0
    %162 = vmatpush1.msra.mxu0 0.0
    %163 = vmatprep.subr.mxu0 0.0
    %164 = vmatpush1.msra.mxu0 %v128
    %165 = vmatprep.subr.mxu0 0.0
    %166 = vmatpush2.msra.mxu0 0.0
    %167 = vmatprep.subr.mxu0 0.0
    %168 = vmatpush2.msra.mxu0 0.0
    %169 = vmatprep.subr.mxu0 0.0
    %170 = vmatpush2.msra.mxu0 0.0
    %171 = vmatprep.subr.mxu0 0.0
    %172 = vmatpush2.msra.mxu0 0.0
    %173 = vmatprep.subr.mxu0 0.0
    %174 = vmatpush2.msra.mxu0 0.0
    %175 = vmatprep.subr.mxu0 0.0
    %176 = vmatpush2.msra.mxu0 0.0
    %177 = vmatprep.subr.mxu0 0.0
    %178 = vmatpush2.msra.mxu0 0.0
    %179 = vmatprep.subr.mxu0 0.0
    %180 = vmatpush2.msra.mxu0 0.0
    %181 = vmatprep.subr.mxu0 0.0
    %182 = vmatpush2.msra.mxu0 0.0
    %183 = vmatprep.subr.mxu0 0.0
    %184 = vmatpush2.msra.mxu0 0.0
    %185 = vmatprep.subr.mxu0 0.0
    %186 = vmatpush2.msra.mxu0 0.0
    %187 = vmatprep.subr.mxu0 0.0
    %188 = vmatpush2.msra.mxu0 0.0
    %189 = vmatprep.subr.mxu0 0.0
    %190 = vmatpush2.msra.mxu0 0.0
    %191 = vmatprep.subr.mxu0 0.0
    %192 = vmatpush2.msra.mxu0 0.0
    %193 = vmatprep.subr.mxu0 0.0
    %194 = vmatpush2.msra.mxu0 0.0
    %195 = vmatprep.subr.mxu0 0.0
    %196 = vmatpush2.msra.mxu0 0.0
    %197 = vmatprep.mubr.f32.mxu0 0.0
    %198 = vmatmul.mubr.f32.gmra.mxu0 %v131
    %v199 = vpop.f32.mrf.mxu0
    %v200 = vadd.f32 0.0, %v199
    %v201 = vpop.f32.mrf.mxu0
    %202 = vdwg.mxu0
    %v203 = vmul.f32 %v200, 0.125
    %v204 = vlaneseq
    %v205 = vshrl.u32 %v204, 7
    %v206 = vsub.s32 0, %v205
    %v207 = vrot.slane %v203, %v206
    %v208 = vsub.f32 %v128, %v207
    %v209 = vmul.f32 %v208, %v208
    %210 = vmatprep.subr.mxu0 0.0
    %211 = vmatpush1.msra.mxu0 0.0
    %212 = vmatprep.subr.mxu0 0.0
    %213 = vmatpush1.msra.mxu0 0.0
    %214 = vmatprep.subr.mxu0 0.0
    %215 = vmatpush1.msra.mxu0 0.0
    %216 = vmatprep.subr.mxu0 0.0
    %217 = vmatpush1.msra.mxu0 0.0
    %218 = vmatprep.subr.mxu0 0.0
    %219 = vmatpush1.msra.mxu0 0.0
    %220 = vmatprep.subr.mxu0 0.0
    %221 = vmatpush1.msra.mxu0 0.0
    %222 = vmatprep.subr.mxu0 0.0
    %223 = vmatpush1.msra.mxu0 0.0
    %224 = vmatprep.subr.mxu0 0.0
    %225 = vmatpush1.msra.mxu0 0.0
    %226 = vmatprep.subr.mxu0 0.0
    %227 = vmatpush1.msra.mxu0 0.0
    %228 = vmatprep.subr.mxu0 0.0
    %229 = vmatpush1.msra.mxu0 0.0
    %230 = vmatprep.subr.mxu0 0.0
    %231 = vmatpush1.msra.mxu0 0.0
    %232 = vmatprep.subr.mxu0 0.0
    %233 = vmatpush1.msra.mxu0 0.0
    %234 = vmatprep.subr.mxu0 0.0
    %235 = vmatpush1.msra.mxu0 0.0
    %236 = vmatprep.subr.mxu0 0.0
    %237 = vmatpush1.msra.mxu0 0.0
    %238 = vmatprep.subr.mxu0 0.0
    %239 = vmatpush1.msra.mxu0 0.0
    %240 = vmatprep.subr.mxu0 0.0
    %241 = vmatpush1.msra.mxu0 %v209
    %242 = vmatprep.subr.mxu0 0.0
    %243 = vmatpush2.msra.mxu0 0.0
    %244 = vmatprep.subr.mxu0 0.0
    %245 = vmatpush2.msra.mxu0 0.0
    %246 = vmatprep.subr.mxu0 0.0
    %247 = vmatpush2.msra.mxu0 0.0
    %248 = vmatprep.subr.mxu0 0.0
    %249 = vmatpush2.msra.mxu0 0.0
    %250 = vmatprep.subr.mxu0 0.0
    %251 = vmatpush2.msra.mxu0 0.0
    %252 = vmatprep.subr.mxu0 0.0
    %253 = vmatpush2.msra.mxu0 0.0
    %254 = vmatprep.subr.mxu0 0.0
    %255 = vmatpush2.msra.mxu0 0.0
    %256 = vmatprep.subr.mxu0 0.0
    %257 = vmatpush2.msra.mxu0 0.0
    %258 = vmatprep.subr.mxu0 0.0
    %259 = vmatpush2.msra.mxu0 0.0
    %260 = vmatprep.subr.mxu0 0.0
    %261 = vmatpush2.msra.mxu0 0.0
    %262 = vmatprep.subr.mxu0 0.0
    %263 = vmatpush2.msra.mxu0 0.0
    %264 = vmatprep.subr.mxu0 0.0
    %265 = vmatpush2.msra.mxu0 0.0
    %266 = vmatprep.subr.mxu0 0.0
    %267 = vmatpush2.msra.mxu0 0.0
    %268 = vmatprep.subr.mxu0 0.0
    %269 = vmatpush2.msra.mxu0 0.0
    %270 = vmatprep.subr.mxu0 0.0
    %271 = vmatpush2.msra.mxu0 0.0
    %272 = vmatprep.subr.mxu0 0.0
    %273 = vmatpush2.msra.mxu0 0.0
    %274 = vmatprep.mubr.f32.mxu0 0.0
    %275 = vmatmul.mubr.f32.gmra.mxu0 %v131
    %v276 = vpop.f32.mrf.mxu0
    %v277 = vadd.f32 0.0, %v276
    %v278 = vpop.f32.mrf.mxu0
    %279 = vdwg.mxu0
    %v280 = vmul.f32 %v277, 0.125
    %v281 = vadd.f32 %v280, 1e-05
    %v282 = vrsqrt.pop %v281
    %v283 = vlaneseq
    %v284 = vshrl.u32 %v283, 7
    %v285 = vsub.s32 0, %v284
    %v286 = vrot.slane %v282, %v285
    %v287 = vmul.f32 %v208, %v286
    %s288 = scalar_lea.vmem [#allocation2], 128
    %v289 = vld [vmem:[%s288] sm:$0xff]
    %v290 = vld [vmem:[%s288 + $0x8] sm:$0xff]
    %v291 = vld [vmem:[%s288 + $0x10] sm:$0xff]
    %v292 = vld [vmem:[%s288 + $0x18] sm:$0xff]
    %v293 = vld [vmem:[%s288 + $0x20] sm:$0xff]
    %v294 = vld [vmem:[%s288 + $0x28] sm:$0xff]
    %v295 = vld [vmem:[%s288 + $0x30] sm:$0xff]
    %v296 = vld [vmem:[%s288 + $0x38] sm:$0xff]
    %v297 = vld [vmem:[%s288 + $0x40] sm:$0xff]
    %v298 = vld [vmem:[%s288 + $0x48] sm:$0xff]
    %v299 = vld [vmem:[%s288 + $0x50] sm:$0xff]
    %v300 = vld [vmem:[%s288 + $0x58] sm:$0xff]
    %v301 = vld [vmem:[%s288 + $0x60] sm:$0xff]
    %v302 = vld [vmem:[%s288 + $0x68] sm:$0xff]
    %v303 = vld [vmem:[%s288 + $0x70] sm:$0xff]
    %v304 = vld [vmem:[%s288 + $0x78] sm:$0xff]
    %s305 = scalar_lea.vmem %s2, 1
    %v306 = vld [vmem:[%s305] sm:$0x1]
    %v308 = vlaneseq
    %v309 = vshrl.u32 %v308, 7
    %v310 = vsub.s32 0, %v309
    %v311 = vrot.slane %v306, %v310
    %313 = vmatprep.subr.mxu0 0.0
    %314 = vmatpush1.msra.mxu0 %v304
    %315 = vmatprep.subr.mxu0 0.0
    %316 = vmatpush1.msra.mxu0 %v303
    %317 = vmatprep.subr.mxu0 0.0
    %318 = vmatpush1.msra.mxu0 %v302
    %319 = vmatprep.subr.mxu0 0.0
    %320 = vmatpush1.msra.mxu0 %v301
    %321 = vmatprep.subr.mxu0 0.0
    %322 = vmatpush1.msra.mxu0 %v300
    %323 = vmatprep.subr.mxu0 0.0
    %324 = vmatpush1.msra.mxu0 %v299
    %325 = vmatprep.subr.mxu0 0.0
    %326 = vmatpush1.msra.mxu0 %v298
    %327 = vmatprep.subr.mxu0 0.0
    %328 = vmatpush1.msra.mxu0 %v297
    %329 = vmatprep.subr.mxu0 0.0
    %330 = vmatpush1.msra.mxu0 %v296
    %331 = vmatprep.subr.mxu0 0.0
    %332 = vmatpush1.msra.mxu0 %v295
    %333 = vmatprep.subr.mxu0 0.0
    %334 = vmatpush1.msra.mxu0 %v294
    %335 = vmatprep.subr.mxu0 0.0
    %336 = vmatpush1.msra.mxu0 %v293
    %337 = vmatprep.subr.mxu0 0.0
    %338 = vmatpush1.msra.mxu0 %v292
    %339 = vmatprep.subr.mxu0 0.0
    %340 = vmatpush1.msra.mxu0 %v291
    %341 = vmatprep.subr.mxu0 0.0
    %342 = vmatpush1.msra.mxu0 %v290
    %343 = vmatprep.subr.mxu0 0.0
    %344 = vmatpush1.msra.mxu0 %v289
    %345 = vmatprep.subr.mxu0 0.0
    %346 = vmatpush2.msra.mxu0 0.0
    %347 = vmatprep.subr.mxu0 0.0
    %348 = vmatpush2.msra.mxu0 0.0
    %349 = vmatprep.subr.mxu0 0.0
    %350 = vmatpush2.msra.mxu0 0.0
    %351 = vmatprep.subr.mxu0 0.0
    %352 = vmatpush2.msra.mxu0 0.0
    %353 = vmatprep.subr.mxu0 0.0
    %354 = vmatpush2.msra.mxu0 0.0
    %355 = vmatprep.subr.mxu0 0.0
    %356 = vmatpush2.msra.mxu0 0.0
    %357 = vmatprep.subr.mxu0 0.0
    %358 = vmatpush2.msra.mxu0 0.0
    %359 = vmatprep.subr.mxu0 0.0
    %360 = vmatpush2.msra.mxu0 0.0
    %361 = vmatprep.subr.mxu0 0.0
    %362 = vmatpush2.msra.mxu0 0.0
    %363 = vmatprep.subr.mxu0 0.0
    %364 = vmatpush2.msra.mxu0 0.0
    %365 = vmatprep.subr.mxu0 0.0
    %366 = vmatpush2.msra.mxu0 0.0
    %367 = vmatprep.subr.mxu0 0.0
    %368 = vmatpush2.msra.mxu0 0.0
    %369 = vmatprep.subr.mxu0 0.0
    %370 = vmatpush2.msra.mxu0 0.0
    %371 = vmatprep.subr.mxu0 0.0
    %372 = vmatpush2.msra.mxu0 0.0
    %373 = vmatprep.subr.mxu0 0.0
    %374 = vmatpush2.msra.mxu0 0.0
    %375 = vmatprep.subr.mxu0 0.0
    %376 = vmatpush2.msra.mxu0 0.0
    %377 = vmatprep.mubr.f32.mxu0 0.0
    %378 = vmatmul.mubr.f32.gmra.mxu0 %v287
    %v379 = vpop.f32.mrf.mxu0
    %v380 = vadd.f32 %v311, %v379
    %v381 = vpop.f32.mrf.mxu0
    %382 = vdwg.mxu0
    %v383 = vxor.u32 %v380, 2147483648
    %v384 = vmul.f32 %v383, 1.442695
    %v385 = vpow.pop %v384
    %v386 = vadd.f32 %v385, 1.0
    %v387 = vrcp.pop %v386
    %v388 = vmul.f32 1.0, %v387
    %389 = vmatprep.subr.mxu0 0.0
    %390 = vmatpush1.msra.mxu0 0.0
    %391 = vmatprep.subr.mxu0 0.0
    %392 = vmatpush1.msra.mxu0 0.0
    %393 = vmatprep.subr.mxu0 0.0
    %394 = vmatpush1.msra.mxu0 0.0
    %395 = vmatprep.subr.mxu0 0.0
    %396 = vmatpush1.msra.mxu0 0.0
    %397 = vmatprep.subr.mxu0 0.0
    %398 = vmatpush1.msra.mxu0 0.0
    %399 = vmatprep.subr.mxu0 0.0
    %400 = vmatpush1.msra.mxu0 0.0
    %401 = vmatprep.subr.mxu0 0.0
    %402 = vmatpush1.msra.mxu0 0.0
    %403 = vmatprep.subr.mxu0 0.0
    %404 = vmatpush1.msra.mxu0 0.0
    %405 = vmatprep.subr.mxu0 0.0
    %406 = vmatpush1.msra.mxu0 0.0
    %407 = vmatprep.subr.mxu0 0.0
    %408 = vmatpush1.msra.mxu0 0.0
    %409 = vmatprep.subr.mxu0 0.0
    %410 = vmatpush1.msra.mxu0 0.0
    %411 = vmatprep.subr.mxu0 0.0
    %412 = vmatpush1.msra.mxu0 0.0
    %413 = vmatprep.subr.mxu0 0.0
    %414 = vmatpush1.msra.mxu0 0.0
    %415 = vmatprep.subr.mxu0 0.0
    %416 = vmatpush1.msra.mxu0 0.0
    %417 = vmatprep.subr.mxu0 0.0
    %418 = vmatpush1.msra.mxu0 0.0
    %419 = vmatprep.subr.mxu0 0.0
    %420 = vmatpush1.msra.mxu0 %v388
    %421 = vmatprep.subr.mxu0 0.0
    %422 = vmatpush2.msra.mxu0 0.0
    %423 = vmatprep.subr.mxu0 0.0
    %424 = vmatpush2.msra.mxu0 0.0
    %425 = vmatprep.subr.mxu0 0.0
    %426 = vmatpush2.msra.mxu0 0.0
    %427 = vmatprep.subr.mxu0 0.0
    %428 = vmatpush2.msra.mxu0 0.0
    %429 = vmatprep.subr.mxu0 0.0
    %430 = vmatpush2.msra.mxu0 0.0
    %431 = vmatprep.subr.mxu0 0.0
    %432 = vmatpush2.msra.mxu0 0.0
    %433 = vmatprep.subr.mxu0 0.0
    %434 = vmatpush2.msra.mxu0 0.0
    %435 = vmatprep.subr.mxu0 0.0
    %436 = vmatpush2.msra.mxu0 0.0
    %437 = vmatprep.subr.mxu0 0.0
    %438 = vmatpush2.msra.mxu0 0.0
    %439 = vmatprep.subr.mxu0 0.0
    %440 = vmatpush2.msra.mxu0 0.0
    %441 = vmatprep.subr.mxu0 0.0
    %442 = vmatpush2.msra.mxu0 0.0
    %443 = vmatprep.subr.mxu0 0.0
    %444 = vmatpush2.msra.mxu0 0.0
    %445 = vmatprep.subr.mxu0 0.0
    %446 = vmatpush2.msra.mxu0 0.0
    %447 = vmatprep.subr.mxu0 0.0
    %448 = vmatpush2.msra.mxu0 0.0
    %449 = vmatprep.subr.mxu0 0.0
    %450 = vmatpush2.msra.mxu0 0.0
    %451 = vmatprep.subr.mxu0 0.0
    %452 = vmatpush2.msra.mxu0 0.0
    %453 = vmatprep.mubr.f32.mxu0 0.0
    %454 = vmatmul.mubr.f32.gmra.mxu0 %v131
    %v455 = vpop.f32.mrf.mxu0
    %v456 = vadd.f32 0.0, %v455
    %v457 = vpop.f32.mrf.mxu0
    %458 = vdwg.mxu0
    %v459 = vmul.f32 %v456, 0.125
    %v460 = vlaneseq
    %v461 = vshrl.u32 %v460, 7
    %v462 = vsub.s32 0, %v461
    %v463 = vrot.slane %v459, %v462
    %v464 = vsub.f32 %v388, %v463
    %v465 = vmul.f32 %v464, %v464
    %466 = vmatprep.subr.mxu0 0.0
    %467 = vmatpush1.msra.mxu0 0.0
    %468 = vmatprep.subr.mxu0 0.0
    %469 = vmatpush1.msra.mxu0 0.0
    %470 = vmatprep.subr.mxu0 0.0
    %471 = vmatpush1.msra.mxu0 0.0
    %472 = vmatprep.subr.mxu0 0.0
    %473 = vmatpush1.msra.mxu0 0.0
    %474 = vmatprep.subr.mxu0 0.0
    %475 = vmatpush1.msra.mxu0 0.0
    %476 = vmatprep.subr.mxu0 0.0
    %477 = vmatpush1.msra.mxu0 0.0
    %478 = vmatprep.subr.mxu0 0.0
    %479 = vmatpush1.msra.mxu0 0.0
    %480 = vmatprep.subr.mxu0 0.0
    %481 = vmatpush1.msra.mxu0 0.0
    %482 = vmatprep.subr.mxu0 0.0
    %483 = vmatpush1.msra.mxu0 0.0
    %484 = vmatprep.subr.mxu0 0.0
    %485 = vmatpush1.msra.mxu0 0.0
    %486 = vmatprep.subr.mxu0 0.0
    %487 = vmatpush1.msra.mxu0 0.0
    %488 = vmatprep.subr.mxu0 0.0
    %489 = vmatpush1.msra.mxu0 0.0
    %490 = vmatprep.subr.mxu0 0.0
    %491 = vmatpush1.msra.mxu0 0.0
    %492 = vmatprep.subr.mxu0 0.0
    %493 = vmatpush1.msra.mxu0 0.0
    %494 = vmatprep.subr.mxu0 0.0
    %495 = vmatpush1.msra.mxu0 0.0
    %496 = vmatprep.subr.mxu0 0.0
    %497 = vmatpush1.msra.mxu0 %v465
    %498 = vmatprep.subr.mxu0 0.0
    %499 = vmatpush2.msra.mxu0 0.0
    %500 = vmatprep.subr.mxu0 0.0
    %501 = vmatpush2.msra.mxu0 0.0
    %502 = vmatprep.subr.mxu0 0.0
    %503 = vmatpush2.msra.mxu0 0.0
    %504 = vmatprep.subr.mxu0 0.0
    %505 = vmatpush2.msra.mxu0 0.0
    %506 = vmatprep.subr.mxu0 0.0
    %507 = vmatpush2.msra.mxu0 0.0
    %508 = vmatprep.subr.mxu0 0.0
    %509 = vmatpush2.msra.mxu0 0.0
    %510 = vmatprep.subr.mxu0 0.0
    %511 = vmatpush2.msra.mxu0 0.0
    %512 = vmatprep.subr.mxu0 0.0
    %513 = vmatpush2.msra.mxu0 0.0
    %514 = vmatprep.subr.mxu0 0.0
    %515 = vmatpush2.msra.mxu0 0.0
    %516 = vmatprep.subr.mxu0 0.0
    %517 = vmatpush2.msra.mxu0 0.0
    %518 = vmatprep.subr.mxu0 0.0
    %519 = vmatpush2.msra.mxu0 0.0
    %520 = vmatprep.subr.mxu0 0.0
    %521 = vmatpush2.msra.mxu0 0.0
    %522 = vmatprep.subr.mxu0 0.0
    %523 = vmatpush2.msra.mxu0 0.0
    %524 = vmatprep.subr.mxu0 0.0
    %525 = vmatpush2.msra.mxu0 0.0
    %526 = vmatprep.subr.mxu0 0.0
    %527 = vmatpush2.msra.mxu0 0.0
    %528 = vmatprep.subr.mxu0 0.0
    %529 = vmatpush2.msra.mxu0 0.0
    %530 = vmatprep.mubr.f32.mxu0 0.0
    %531 = vmatmul.mubr.f32.gmra.mxu0 %v131
    %v532 = vpop.f32.mrf.mxu0
    %v533 = vadd.f32 0.0, %v532
    %v534 = vpop.f32.mrf.mxu0
    %535 = vdwg.mxu0
    %v536 = vmul.f32 %v533, 0.125
    %v537 = vadd.f32 %v536, 1e-05
    %v538 = vrsqrt.pop %v537
    %v539 = vlaneseq
    %v540 = vshrl.u32 %v539, 7
    %v541 = vsub.s32 0, %v540
    %v542 = vrot.slane %v538, %v541
    %v543 = vmul.f32 %v464, %v542
    %s544 = scalar_lea.vmem [#allocation2], 256
    %v545 = vld [vmem:[%s544] sm:$0xff]
    %v546 = vld [vmem:[%s544 + $0x8] sm:$0xff]
    %v547 = vld [vmem:[%s544 + $0x10] sm:$0xff]
    %v548 = vld [vmem:[%s544 + $0x18] sm:$0xff]
    %v549 = vld [vmem:[%s544 + $0x20] sm:$0xff]
    %v550 = vld [vmem:[%s544 + $0x28] sm:$0xff]
    %v551 = vld [vmem:[%s544 + $0x30] sm:$0xff]
    %v552 = vld [vmem:[%s544 + $0x38] sm:$0xff]
    %v553 = vld [vmem:[%s544 + $0x40] sm:$0xff]
    %v554 = vld [vmem:[%s544 + $0x48] sm:$0xff]
    %v555 = vld [vmem:[%s544 + $0x50] sm:$0xff]
    %v556 = vld [vmem:[%s544 + $0x58] sm:$0xff]
    %v557 = vld [vmem:[%s544 + $0x60] sm:$0xff]
    %v558 = vld [vmem:[%s544 + $0x68] sm:$0xff]
    %v559 = vld [vmem:[%s544 + $0x70] sm:$0xff]
    %v560 = vld [vmem:[%s544 + $0x78] sm:$0xff]
    %s561 = scalar_lea.vmem %s2, 2
    %v562 = vld [vmem:[%s561] sm:$0x1]
    %563 = vmatprep.subr.mxu0 0.0
    %564 = vmatpush1.msra.mxu0 0.0
    %565 = vmatprep.subr.mxu0 0.0
    %566 = vmatpush1.msra.mxu0 0.0
    %567 = vmatprep.subr.mxu0 0.0
    %568 = vmatpush1.msra.mxu0 0.0
    %569 = vmatprep.subr.mxu0 0.0
    %570 = vmatpush1.msra.mxu0 0.0
    %571 = vmatprep.subr.mxu0 0.0
    %572 = vmatpush1.msra.mxu0 0.0
    %573 = vmatprep.subr.mxu0 0.0
    %574 = vmatpush1.msra.mxu0 0.0
    %575 = vmatprep.subr.mxu0 0.0
    %576 = vmatpush1.msra.mxu0 0.0
    %577 = vmatprep.subr.mxu0 0.0
    %578 = vmatpush1.msra.mxu0 0.0
    %579 = vmatprep.subr.mxu0 0.0
    %580 = vmatpush1.msra.mxu0 0.0
    %581 = vmatprep.subr.mxu0 0.0
    %582 = vmatpush1.msra.mxu0 0.0
    %583 = vmatprep.subr.mxu0 0.0
    %584 = vmatpush1.msra.mxu0 0.0
    %585 = vmatprep.subr.mxu0 0.0
    %586 = vmatpush1.msra.mxu0 0.0
    %587 = vmatprep.subr.mxu0 0.0
    %588 = vmatpush1.msra.mxu0 0.0
    %589 = vmatprep.subr.mxu0 0.0
    %590 = vmatpush1.msra.mxu0 0.0
    %591 = vmatprep.subr.mxu0 0.0
    %592 = vmatpush1.msra.mxu0 0.0
    %593 = vmatprep.subr.mxu0 0.0
    %594 = vmatpush1.msra.mxu0 %v543
    %595 = vmatprep.subr.mxu0 0.0
    %596 = vmatpush2.msra.mxu0 0.0
    %597 = vmatprep.subr.mxu0 0.0
    %598 = vmatpush2.msra.mxu0 0.0
    %599 = vmatprep.subr.mxu0 0.0
    %600 = vmatpush2.msra.mxu0 0.0
    %601 = vmatprep.subr.mxu0 0.0
    %602 = vmatpush2.msra.mxu0 0.0
    %603 = vmatprep.subr.mxu0 0.0
    %604 = vmatpush2.msra.mxu0 0.0
    %605 = vmatprep.subr.mxu0 0.0
    %606 = vmatpush2.msra.mxu0 0.0
    %607 = vmatprep.subr.mxu0 0.0
    %608 = vmatpush2.msra.mxu0 0.0
    %609 = vmatprep.subr.mxu0 0.0
    %610 = vmatpush2.msra.mxu0 0.0
    %611 = vmatprep.subr.mxu0 0.0
    %612 = vmatpush2.msra.mxu0 0.0
    %613 = vmatprep.subr.mxu0 0.0
    %614 = vmatpush2.msra.mxu0 0.0
    %615 = vmatprep.subr.mxu0 0.0
    %616 = vmatpush2.msra.mxu0 0.0
    %617 = vmatprep.subr.mxu0 0.0
    %618 = vmatpush2.msra.mxu0 0.0
    %619 = vmatprep.subr.mxu0 0.0
    %620 = vmatpush2.msra.mxu0 0.0
    %621 = vmatprep.subr.mxu0 0.0
    %622 = vmatpush2.msra.mxu0 0.0
    %623 = vmatprep.subr.mxu0 0.0
    %624 = vmatpush2.msra.mxu0 0.0
    %625 = vmatprep.subr.mxu0 0.0
    %626 = vmatpush2.msra.mxu0 0.0
    %627 = vmatprep.mubr.f32.mxu0 0.0
    %628 = vmatmul.mubr.f32.gmra.mxu0 %v131
    %v629 = vpop.f32.mrf.mxu0
    %v630 = vadd.f32 0.0, %v629
    %v631 = vpop.f32.mrf.mxu0
    %632 = vdwg.mxu0
    %v633 = vmul.f32 %v630, 0.125
    %v634 = vlaneseq
    %v635 = vshrl.u32 %v634, 7
    %v636 = vsub.s32 0, %v635
    %v637 = vrot.slane %v633, %v636
    %v638 = vsub.f32 %v543, %v637
    %v639 = vmul.f32 %v638, %v638
    %640 = vmatprep.subr.mxu0 0.0
    %641 = vmatpush1.msra.mxu0 0.0
    %642 = vmatprep.subr.mxu0 0.0
    %643 = vmatpush1.msra.mxu0 0.0
    %644 = vmatprep.subr.mxu0 0.0
    %645 = vmatpush1.msra.mxu0 0.0
    %646 = vmatprep.subr.mxu0 0.0
    %647 = vmatpush1.msra.mxu0 0.0
    %648 = vmatprep.subr.mxu0 0.0
    %649 = vmatpush1.msra.mxu0 0.0
    %650 = vmatprep.subr.mxu0 0.0
    %651 = vmatpush1.msra.mxu0 0.0
    %652 = vmatprep.subr.mxu0 0.0
    %653 = vmatpush1.msra.mxu0 0.0
    %654 = vmatprep.subr.mxu0 0.0
    %655 = vmatpush1.msra.mxu0 0.0
    %656 = vmatprep.subr.mxu0 0.0
    %657 = vmatpush1.msra.mxu0 0.0
    %658 = vmatprep.subr.mxu0 0.0
    %659 = vmatpush1.msra.mxu0 0.0
    %660 = vmatprep.subr.mxu0 0.0
    %661 = vmatpush1.msra.mxu0 0.0
    %662 = vmatprep.subr.mxu0 0.0
    %663 = vmatpush1.msra.mxu0 0.0
    %664 = vmatprep.subr.mxu0 0.0
    %665 = vmatpush1.msra.mxu0 0.0
    %666 = vmatprep.subr.mxu0 0.0
    %667 = vmatpush1.msra.mxu0 0.0
    %668 = vmatprep.subr.mxu0 0.0
    %669 = vmatpush1.msra.mxu0 0.0
    %670 = vmatprep.subr.mxu0 0.0
    %671 = vmatpush1.msra.mxu0 %v639
    %672 = vmatprep.subr.mxu0 0.0
    %673 = vmatpush2.msra.mxu0 0.0
    %674 = vmatprep.subr.mxu0 0.0
    %675 = vmatpush2.msra.mxu0 0.0
    %676 = vmatprep.subr.mxu0 0.0
    %677 = vmatpush2.msra.mxu0 0.0
    %678 = vmatprep.subr.mxu0 0.0
    %679 = vmatpush2.msra.mxu0 0.0
    %680 = vmatprep.subr.mxu0 0.0
    %681 = vmatpush2.msra.mxu0 0.0
    %682 = vmatprep.subr.mxu0 0.0
    %683 = vmatpush2.msra.mxu0 0.0
    %684 = vmatprep.subr.mxu0 0.0
    %685 = vmatpush2.msra.mxu0 0.0
    %686 = vmatprep.subr.mxu0 0.0
    %687 = vmatpush2.msra.mxu0 0.0
    %688 = vmatprep.subr.mxu0 0.0
    %689 = vmatpush2.msra.mxu0 0.0
    %690 = vmatprep.subr.mxu0 0.0
    %691 = vmatpush2.msra.mxu0 0.0
    %692 = vmatprep.subr.mxu0 0.0
    %693 = vmatpush2.msra.mxu0 0.0
    %694 = vmatprep.subr.mxu0 0.0
    %695 = vmatpush2.msra.mxu0 0.0
    %696 = vmatprep.subr.mxu0 0.0
    %697 = vmatpush2.msra.mxu0 0.0
    %698 = vmatprep.subr.mxu0 0.0
    %699 = vmatpush2.msra.mxu0 0.0
    %700 = vmatprep.subr.mxu0 0.0
    %701 = vmatpush2.msra.mxu0 0.0
    %702 = vmatprep.subr.mxu0 0.0
    %703 = vmatpush2.msra.mxu0 0.0
    %704 = vmatprep.mubr.f32.mxu0 0.0
    %705 = vmatmul.mubr.f32.gmra.mxu0 %v131
    %v706 = vpop.f32.mrf.mxu0
    %v707 = vadd.f32 0.0, %v706
    %v708 = vpop.f32.mrf.mxu0
    %709 = vdwg.mxu0
    %v710 = vmul.f32 %v707, 0.125
    %v711 = vadd.f32 %v710, 1e-05
    %v712 = vrsqrt.pop %v711
    %v713 = vlaneseq
    %v714 = vshrl.u32 %v713, 7
    %v715 = vsub.s32 0, %v714
    %v716 = vrot.slane %v712, %v715
    %v717 = vmul.f32 %v638, %v716
    %v719 = vlaneseq
    %v720 = vshrl.u32 %v719, 7
    %v721 = vsub.s32 0, %v720
    %v722 = vrot.slane %v562, %v721
    %724 = vmatprep.subr.mxu0 0.0
    %725 = vmatpush1.msra.mxu0 %v560
    %726 = vmatprep.subr.mxu0 0.0
    %727 = vmatpush1.msra.mxu0 %v559
    %728 = vmatprep.subr.mxu0 0.0
    %729 = vmatpush1.msra.mxu0 %v558
    %730 = vmatprep.subr.mxu0 0.0
    %731 = vmatpush1.msra.mxu0 %v557
    %732 = vmatprep.subr.mxu0 0.0
    %733 = vmatpush1.msra.mxu0 %v556
    %734 = vmatprep.subr.mxu0 0.0
    %735 = vmatpush1.msra.mxu0 %v555
    %736 = vmatprep.subr.mxu0 0.0
    %737 = vmatpush1.msra.mxu0 %v554
    %738 = vmatprep.subr.mxu0 0.0
    %739 = vmatpush1.msra.mxu0 %v553
    %740 = vmatprep.subr.mxu0 0.0
    %741 = vmatpush1.msra.mxu0 %v552
    %742 = vmatprep.subr.mxu0 0.0
    %743 = vmatpush1.msra.mxu0 %v551
    %744 = vmatprep.subr.mxu0 0.0
    %745 = vmatpush1.msra.mxu0 %v550
    %746 = vmatprep.subr.mxu0 0.0
    %747 = vmatpush1.msra.mxu0 %v549
    %748 = vmatprep.subr.mxu0 0.0
    %749 = vmatpush1.msra.mxu0 %v548
    %750 = vmatprep.subr.mxu0 0.0
    %751 = vmatpush1.msra.mxu0 %v547
    %752 = vmatprep.subr.mxu0 0.0
    %753 = vmatpush1.msra.mxu0 %v546
    %754 = vmatprep.subr.mxu0 0.0
    %755 = vmatpush1.msra.mxu0 %v545
    %756 = vmatprep.subr.mxu0 0.0
    %757 = vmatpush2.msra.mxu0 0.0
    %758 = vmatprep.subr.mxu0 0.0
    %759 = vmatpush2.msra.mxu0 0.0
    %760 = vmatprep.subr.mxu0 0.0
    %761 = vmatpush2.msra.mxu0 0.0
    %762 = vmatprep.subr.mxu0 0.0
    %763 = vmatpush2.msra.mxu0 0.0
    %764 = vmatprep.subr.mxu0 0.0
    %765 = vmatpush2.msra.mxu0 0.0
    %766 = vmatprep.subr.mxu0 0.0
    %767 = vmatpush2.msra.mxu0 0.0
    %768 = vmatprep.subr.mxu0 0.0
    %769 = vmatpush2.msra.mxu0 0.0
    %770 = vmatprep.subr.mxu0 0.0
    %771 = vmatpush2.msra.mxu0 0.0
    %772 = vmatprep.subr.mxu0 0.0
    %773 = vmatpush2.msra.mxu0 0.0
    %774 = vmatprep.subr.mxu0 0.0
    %775 = vmatpush2.msra.mxu0 0.0
    %776 = vmatprep.subr.mxu0 0.0
    %777 = vmatpush2.msra.mxu0 0.0
    %778 = vmatprep.subr.mxu0 0.0
    %779 = vmatpush2.msra.mxu0 0.0
    %780 = vmatprep.subr.mxu0 0.0
    %781 = vmatpush2.msra.mxu0 0.0
    %782 = vmatprep.subr.mxu0 0.0
    %783 = vmatpush2.msra.mxu0 0.0
    %784 = vmatprep.subr.mxu0 0.0
    %785 = vmatpush2.msra.mxu0 0.0
    %786 = vmatprep.subr.mxu0 0.0
    %787 = vmatpush2.msra.mxu0 0.0
    %788 = vmatprep.mubr.f32.mxu0 0.0
    %789 = vmatmul.mubr.f32.gmra.mxu0 %v717
    %v790 = vpop.f32.mrf.mxu0
    %v791 = vadd.f32 %v722, %v790
    %v792 = vpop.f32.mrf.mxu0
    %793 = vdwg.mxu0
    %794 = vst [vmem:[#allocation5] sm:$0xff] %v791
    // Predicated region
    $region18: #{_forward.1} parent=1 // pred_check
      _
    $region19: #{_forward.1} parent=1 // pred_check_branch
      %796 = sbr.rel (0) target = $region21
    $region20: #{_forward.1} parent=1 // pred_region
      %s798 = ssub.s32 128, 128
      %799 = vsyncadd [#allocation4], %s798
      %s801 = sshll.u32 [#allocation5], 4
      %s802 = int_to_ptr.vmem [resolvable:$true] %s801
      %804 = dma.vmem_to_hbm [thread:$0]  %s802, 128, %s3, [#allocation4]
    $region21: #{_forward.1} parent=1 // pred_fallthru
      _
    // Predicated region
    $region22: #{_forward.1} parent=1 // pred_check
      _
    $region23: #{_forward.1} parent=1 // pred_check_branch
      %806 = sbr.rel (0) target = $region25
    $region24: #{_forward.1} parent=1 // pred_region
      %807 = dma.done [#allocation4], 128
    $region25: #{_forward.1} parent=1 // pred_fallthru
      _
    %808 = vsyncpa [#allocation3], 1
    %809 = vsyncpa [#allocation4], 1

</llo_original>
